<compile_context>
chip_gen: v5e
topology: v5e:2x2
jax: 0.10.0
libtpu: 0.0.40
codegen_flags: <defaults>
</compile_context>

<pallas_src>
import jax
import jax.numpy as jnp
from jax.experimental import pallas as pl
from jax.experimental.pallas import tpu as pltpu


_TM = 1024    # lane tile: spatial positions per grid step
_CSUB = 8     # sublane rows per slab (3 real channels padded to 8)


def conv1x1_add_kernel(w_ref, b_ref, x_ref, noise_ref, o_ref):
    # w_ref:     SMEM (3, 3) f32, w_ref[o, c] = weight[o, c, 0, 0]
    # b_ref:     SMEM (3,)   f32 = bias + 1.0  ("+ other" folded in)
    # x_ref, noise_ref, o_ref: VMEM (8, _TM) f32, rows 0..2 = channels
    x0 = x_ref[0:1, :]
    x1 = x_ref[1:2, :]
    x2 = x_ref[2:3, :]
    for o in range(3):  # unrolled at trace time -> 9 VPU FMAs total
        o_ref[o:o + 1, :] = (w_ref[o, 0] * x0
                             + w_ref[o, 1] * x1
                             + w_ref[o, 2] * x2
                             + b_ref[o]
                             + noise_ref[o:o + 1, :])


def model_forward(x_nchw, weight, bias, noise_nchw):
    """x_nchw: (N, 3, H, W); weight: (3, 3, 1, 1); bias: (3,);
    noise_nchw: (N, 3, H+2, W+2).  Returns (N, 3, H+2, W+2)."""
    N, Cin, H, W = x_nchw.shape
    Cout = weight.shape[0]
    assert Cin == 3 and Cout == 3, "kernel is specialized for 3->3 channels"
    Hp, Wp = H + 2, W + 2
    M = N * Hp * Wp
    M_pad = ((M + _TM - 1) // _TM) * _TM

    # conv padding=1 with a 1x1 kernel == zero-pad spatially by 1
    xp = jnp.pad(x_nchw, ((0, 0), (0, 0), (1, 1), (1, 1)))

    # channels-on-sublane / spatial-on-lane slabs: (C, M) -> (8, M_pad)
    x_cm = jnp.transpose(xp, (1, 0, 2, 3)).reshape(Cin, M)
    n_cm = jnp.transpose(noise_nchw, (1, 0, 2, 3)).reshape(Cout, M)
    x_slab = jnp.pad(x_cm, ((0, _CSUB - Cin), (0, M_pad - M)))
    n_slab = jnp.pad(n_cm, ((0, _CSUB - Cout), (0, M_pad - M)))

    w_oc = weight[:, :, 0, 0].astype(jnp.float32)   # (Cout, Cin)
    b_p1 = (bias + 1.0).astype(jnp.float32)         # fold "+ other(=1)"

    out_slab = pl.pallas_call(
        conv1x1_add_kernel,
        out_shape=jax.ShapeDtypeStruct((_CSUB, M_pad), jnp.float32),
        grid=(M_pad // _TM,),
        in_specs=[
            pl.BlockSpec(memory_space=pltpu.MemorySpace.SMEM),   # weights
            pl.BlockSpec(memory_space=pltpu.MemorySpace.SMEM),   # bias + 1
            pl.BlockSpec((_CSUB, _TM), lambda i: (0, i)),        # x slab
            pl.BlockSpec((_CSUB, _TM), lambda i: (0, i)),        # noise slab
        ],
        out_specs=pl.BlockSpec((_CSUB, _TM), lambda i: (0, i)),
        input_output_aliases={3: 0},   # write result over the noise buffer
        compiler_params=pltpu.CompilerParams(
            dimension_semantics=("parallel",)),
    )(w_oc, b_p1, x_slab, n_slab)

    # strip channel/lane padding, back to NCHW
    out_cm = out_slab[:Cout, :M]
    return jnp.transpose(out_cm.reshape(Cout, N, Hp, Wp), (1, 0, 2, 3))


if __name__ == "__main__":
    key = jax.random.PRNGKey(0)
    k_x, k_w, k_b, k_n = jax.random.split(key, 4)

    # shapes from the module spec: x1 = randn(1, 3, 64, 64), Conv2d(3, 3, 1)
    N, C, H, W = 1, 3, 64, 64
    x1 = jax.random.normal(k_x, (N, C, H, W), dtype=jnp.float32)
    weight = jax.random.normal(k_w, (3, 3, 1, 1), dtype=jnp.float32) * 0.1
    bias = jax.random.normal(k_b, (3,), dtype=jnp.float32) * 0.1
    # other2 = torch.randn(v1.shape) -> deterministic explicit input here
    noise = jax.random.normal(k_n, (N, 3, H + 2, W + 2), dtype=jnp.float32)

    fwd = jax.jit(model_forward)
    out = fwd(x1, weight, bias, noise)
    jax.block_until_ready(out)

    # pure-JAX reference (1x1 conv == channel matmul)
    xp = jnp.pad(x1, ((0, 0), (0, 0), (1, 1), (1, 1)))
    v1_ref = (jnp.einsum("nchw,oc->nohw", xp, weight[:, :, 0, 0])
              + bias[None, :, None, None])
    v2_ref = v1_ref + 1.0 + noise

    assert out.shape == (N, 3, H + 2, W + 2)
    assert jnp.max(jnp.abs(out - v2_ref)) < 1e-4

    print("KERNEL_OK")
</pallas_src>

<mosaic_0001>
module attributes {stable_mosaic.version = 11 : i64} {
  func.func @conv1x1_add_kernel(%arg0: i32, %arg1: memref<3x3xf32, #tpu.memory_space<smem>>, %arg2: memref<3xf32, #tpu.memory_space<smem>>, %arg3: memref<8x1024xf32, #tpu.memory_space<vmem>>, %arg4: memref<8x1024xf32, #tpu.memory_space<vmem>>, %arg5: memref<8x1024xf32, #tpu.memory_space<vmem>>) attributes {dimension_semantics = [#tpu.dimension_semantics<parallel>], iteration_bounds = array<i64: 5>, scalar_prefetch = 0 : i64, scratch_operands = 0 : i64, tpu.core_type = #tpu.core_type<tc>, window_params = [{transform_indices = @transform_0, window_bounds = array<i64: 3, 3>}, {transform_indices = @transform_1, window_bounds = array<i64: 3>}, {transform_indices = @transform_2, window_bounds = array<i64: 8, 1024>}, {transform_indices = @transform_3, window_bounds = array<i64: 8, 1024>}, {transform_indices = @transform_4, window_bounds = array<i64: 8, 1024>}]} {
    %c0 = arith.constant 0 : index
    %c0_0 = arith.constant 0 : index
    %0 = vector.load %arg3[%c0, %c0_0] : memref<8x1024xf32, #tpu.memory_space<vmem>>, vector<1x1024xf32>
    %c1 = arith.constant 1 : index
    %c0_1 = arith.constant 0 : index
    %1 = vector.load %arg3[%c1, %c0_1] : memref<8x1024xf32, #tpu.memory_space<vmem>>, vector<1x1024xf32>
    %c2 = arith.constant 2 : index
    %c0_2 = arith.constant 0 : index
    %2 = vector.load %arg3[%c2, %c0_2] : memref<8x1024xf32, #tpu.memory_space<vmem>>, vector<1x1024xf32>
    %c0_3 = arith.constant 0 : index
    %c0_4 = arith.constant 0 : index
    %3 = memref.load %arg1[%c0_3, %c0_4] : memref<3x3xf32, #tpu.memory_space<smem>>
    %4 = vector.broadcast %3 : f32 to vector<1x1024xf32>
    %5 = arith.mulf %4, %0 : vector<1x1024xf32>
    %c0_5 = arith.constant 0 : index
    %c1_6 = arith.constant 1 : index
    %6 = memref.load %arg1[%c0_5, %c1_6] : memref<3x3xf32, #tpu.memory_space<smem>>
    %7 = vector.broadcast %6 : f32 to vector<1x1024xf32>
    %8 = arith.mulf %7, %1 : vector<1x1024xf32>
    %9 = arith.addf %5, %8 : vector<1x1024xf32>
    %c0_7 = arith.constant 0 : index
    %c2_8 = arith.constant 2 : index
    %10 = memref.load %arg1[%c0_7, %c2_8] : memref<3x3xf32, #tpu.memory_space<smem>>
    %11 = vector.broadcast %10 : f32 to vector<1x1024xf32>
    %12 = arith.mulf %11, %2 : vector<1x1024xf32>
    %13 = arith.addf %9, %12 : vector<1x1024xf32>
    %c0_9 = arith.constant 0 : index
    %14 = memref.load %arg2[%c0_9] : memref<3xf32, #tpu.memory_space<smem>>
    %15 = vector.broadcast %14 : f32 to vector<1x1024xf32>
    %16 = arith.addf %13, %15 : vector<1x1024xf32>
    %c0_10 = arith.constant 0 : index
    %c0_11 = arith.constant 0 : index
    %17 = vector.load %arg4[%c0_10, %c0_11] : memref<8x1024xf32, #tpu.memory_space<vmem>>, vector<1x1024xf32>
    %18 = arith.addf %16, %17 : vector<1x1024xf32>
    %c0_12 = arith.constant 0 : index
    %c0_13 = arith.constant 0 : index
    %19 = vector.load %arg5[%c0_12, %c0_13] : memref<8x1024xf32, #tpu.memory_space<vmem>>, vector<1x1024xf32>
    tpu.vector_store %arg5[%c0_12, %c0_13], %18 {strides = array<i32>} : memref<8x1024xf32, #tpu.memory_space<vmem>>, vector<1x1024xf32>,
    %c1_14 = arith.constant 1 : index
    %c0_15 = arith.constant 0 : index
    %20 = memref.load %arg1[%c1_14, %c0_15] : memref<3x3xf32, #tpu.memory_space<smem>>
    %21 = vector.broadcast %20 : f32 to vector<1x1024xf32>
    %22 = arith.mulf %21, %0 : vector<1x1024xf32>
    %c1_16 = arith.constant 1 : index
    %c1_17 = arith.constant 1 : index
    %23 = memref.load %arg1[%c1_16, %c1_17] : memref<3x3xf32, #tpu.memory_space<smem>>
    %24 = vector.broadcast %23 : f32 to vector<1x1024xf32>
    %25 = arith.mulf %24, %1 : vector<1x1024xf32>
    %26 = arith.addf %22, %25 : vector<1x1024xf32>
    %c1_18 = arith.constant 1 : index
    %c2_19 = arith.constant 2 : index
    %27 = memref.load %arg1[%c1_18, %c2_19] : memref<3x3xf32, #tpu.memory_space<smem>>
    %28 = vector.broadcast %27 : f32 to vector<1x1024xf32>
    %29 = arith.mulf %28, %2 : vector<1x1024xf32>
    %30 = arith.addf %26, %29 : vector<1x1024xf32>
    %c1_20 = arith.constant 1 : index
    %31 = memref.load %arg2[%c1_20] : memref<3xf32, #tpu.memory_space<smem>>
    %32 = vector.broadcast %31 : f32 to vector<1x1024xf32>
    %33 = arith.addf %30, %32 : vector<1x1024xf32>
    %c1_21 = arith.constant 1 : index
    %c0_22 = arith.constant 0 : index
    %34 = vector.load %arg4[%c1_21, %c0_22] : memref<8x1024xf32, #tpu.memory_space<vmem>>, vector<1x1024xf32>
    %35 = arith.addf %33, %34 : vector<1x1024xf32>
    %c1_23 = arith.constant 1 : index
    %c0_24 = arith.constant 0 : index
    %36 = vector.load %arg5[%c1_23, %c0_24] : memref<8x1024xf32, #tpu.memory_space<vmem>>, vector<1x1024xf32>
    tpu.vector_store %arg5[%c1_23, %c0_24], %35 {strides = array<i32>} : memref<8x1024xf32, #tpu.memory_space<vmem>>, vector<1x1024xf32>,
    %c2_25 = arith.constant 2 : index
    %c0_26 = arith.constant 0 : index
    %37 = memref.load %arg1[%c2_25, %c0_26] : memref<3x3xf32, #tpu.memory_space<smem>>
    %38 = vector.broadcast %37 : f32 to vector<1x1024xf32>
    %39 = arith.mulf %38, %0 : vector<1x1024xf32>
    %c2_27 = arith.constant 2 : index
    %c1_28 = arith.constant 1 : index
    %40 = memref.load %arg1[%c2_27, %c1_28] : memref<3x3xf32, #tpu.memory_space<smem>>
    %41 = vector.broadcast %40 : f32 to vector<1x1024xf32>
    %42 = arith.mulf %41, %1 : vector<1x1024xf32>
    %43 = arith.addf %39, %42 : vector<1x1024xf32>
    %c2_29 = arith.constant 2 : index
    %c2_30 = arith.constant 2 : index
    %44 = memref.load %arg1[%c2_29, %c2_30] : memref<3x3xf32, #tpu.memory_space<smem>>
    %45 = vector.broadcast %44 : f32 to vector<1x1024xf32>
    %46 = arith.mulf %45, %2 : vector<1x1024xf32>
    %47 = arith.addf %43, %46 : vector<1x1024xf32>
    %c2_31 = arith.constant 2 : index
    %48 = memref.load %arg2[%c2_31] : memref<3xf32, #tpu.memory_space<smem>>
    %49 = vector.broadcast %48 : f32 to vector<1x1024xf32>
    %50 = arith.addf %47, %49 : vector<1x1024xf32>
    %c2_32 = arith.constant 2 : index
    %c0_33 = arith.constant 0 : index
    %51 = vector.load %arg4[%c2_32, %c0_33] : memref<8x1024xf32, #tpu.memory_space<vmem>>, vector<1x1024xf32>
    %52 = arith.addf %50, %51 : vector<1x1024xf32>
    %c2_34 = arith.constant 2 : index
    %c0_35 = arith.constant 0 : index
    %53 = vector.load %arg5[%c2_34, %c0_35] : memref<8x1024xf32, #tpu.memory_space<vmem>>, vector<1x1024xf32>
    tpu.vector_store %arg5[%c2_34, %c0_35], %52 {strides = array<i32>} : memref<8x1024xf32, #tpu.memory_space<vmem>>, vector<1x1024xf32>,
    return
  }
  func.func @transform_0(%arg0: i32) -> (i32, i32) {
    %c0_i32 = arith.constant 0 : i32
    %c0_i32_0 = arith.constant 0 : i32
    %c0_i32_1 = arith.constant 0 : i32
    return %c0_i32, %c0_i32_0 : i32, i32
  }
  func.func @transform_1(%arg0: i32) -> i32 {
    %c0_i32 = arith.constant 0 : i32
    %c0_i32_0 = arith.constant 0 : i32
    return %c0_i32 : i32
  }
  func.func @transform_2(%arg0: i32) -> (i32, i32) {
    %c0_i32 = arith.constant 0 : i32
    %c0_i32_0 = arith.constant 0 : i32
    return %c0_i32, %arg0 : i32, i32
  }
  func.func @transform_3(%arg0: i32) -> (i32, i32) {
    %c0_i32 = arith.constant 0 : i32
    %c0_i32_0 = arith.constant 0 : i32
    return %c0_i32, %arg0 : i32, i32
  }
  func.func @transform_4(%arg0: i32) -> (i32, i32) {
    %c0_i32 = arith.constant 0 : i32
    %c0_i32_0 = arith.constant 0 : i32
    return %c0_i32, %arg0 : i32, i32
  }
}

</mosaic_0001>

<llo_original>
// kernel: model_forward.1
$region0: #{model_forward.1}
  #allocation0 [shape = 'u32[]', space=smem, size = 0x4, offset = 0x4, fixed_abs, tag = 'smem constant byte address 0x4 - core index']
  #allocation1 [shape = 'u32[72,128]{1,0:T(1,128)}', space=vmem, size = 0x9000, scoped, tag = 'internal scratch']
  %s0 = inlined_call_operand.vmem [shape: f32[3,3], index: 0, kind: input, shape index: {}]
  %s1 = inlined_call_operand.vmem [shape: f32[3], index: 1, kind: input, shape index: {}]
  %s2 = inlined_call_operand.vmem [shape: f32[8,5120], index: 2, kind: input, shape index: {}]
  %s3 = inlined_call_operand.vmem [shape: f32[8,5120], index: 3, kind: input, shape index: {}, may-alias: {3,4}]
  %s4 = inlined_call_operand.vmem [shape: f32[8,5120], index: 4, kind: output, shape index: {}, may-alias: {3,4}]
  %s5 = sld [smem:[#allocation0]]
  $region57: #{model_forward.1} parent=0
    _
  %s7 = ssub.s32 1, %s5
  %s8 = scalar_select 0, %s7, %s5
  $region1: #{model_forward.1} parent=0
    #allocation2 [shape = 'u8[2048]{0}', space=smem, size = 0x800, scoped, tag = 'input window, operand 0, single buffered']
    #allocation3 [shape = 's32[2]{0}', space=sflag, size = 0x8, scoped, tag = 'scoped memory for model_forward.1']
    #allocation4 [shape = 'u8[512]{0}', space=smem, size = 0x200, scoped, tag = 'input window, operand 1, single buffered']
    #allocation5 [shape = 's32[1]{0}', space=sflag, size = 0x4, scoped, tag = 'scoped memory for model_forward.1']
    %9 = vsyncpa [#allocation3], 0
    %10 = vsyncpa [#allocation5], 0
    loop: start=0, step=1, limit=7
    $region2: #{model_forward.1} parent=1 // loop_pre_header
      _
    $region3: #{model_forward.1} parent=1 // loop_header
      %s12 = sphi 0, %s16
      %p13 = scmp.ge.s32.totalorder %s12, 7
      %s20 = sphi 0, %s20
      %s22 = sphi 0, %s20
      %s23 = sphi 0, %s22
      %s37 = sphi 0, %s23
      %s41 = sphi 0, %s41
      %s43 = sphi 0, %s41
      %s44 = sphi 0, %s43
      %s58 = sphi 0, %s44
      %s64 = sphi 0, %s66
      %s67 = sphi 0, %s64
      %s68 = sphi 0, %s67
      %s84 = sphi 0, %s68
      %s90 = sphi 0, %s92
      %s93 = sphi 0, %s90
      %s94 = sphi 0, %s93
      %s110 = sphi 0, %s94
      %s116 = sphi 0, %s118
      %s119 = sphi 0, %s116
      %s120 = sphi 0, %s119
      %s136 = sphi 0, %s120
    $region4: #{model_forward.1} parent=1 // loop_header_branch
      %15 = sbr.rel (%p13) target = $region8
    $region5: #{model_forward.1} parent=1 // loop_body
      %s17 = ssub.s32 %s12, 1
      %s18 = ssub.s32 %s12, 2
      %s19 = sadd.s32 %s12, 1
      %s21 = sadd.s32 %s20, 1
      %p24 = scmp.eq.s32.totalorder %s12, 4
      %p25 = scmp.ne.s32.totalorder %s20, %s22
      %p26 = scmp.eq.s32.totalorder %s12, 0
      %p27 = por %p25, %p26
      %p28 = scmp.ne.s32.totalorder %s20, %s22
      %p29 = scmp.eq.s32.totalorder %s17, 4
      %p30 = por %p28, %p29
      %p31 = scmp.ne.s32.totalorder %s22, %s23
      %p32 = scmp.eq.s32.totalorder %s17, 0
      %p33 = por %p31, %p32
      %p34 = scmp.ne.s32.totalorder %s22, %s23
      %p35 = scmp.eq.s32.totalorder %s18, 4
      %p36 = por %p34, %p35
      %p38 = scmp.ne.s32.totalorder %s23, %s37
      %p39 = scmp.eq.s32.totalorder %s18, 0
      %p40 = por %p38, %p39
      %s42 = sadd.s32 %s41, 1
      %p45 = scmp.eq.s32.totalorder %s12, 4
      %p46 = scmp.ne.s32.totalorder %s41, %s43
      %p47 = scmp.eq.s32.totalorder %s12, 0
      %p48 = por %p46, %p47
      %p49 = scmp.ne.s32.totalorder %s41, %s43
      %p50 = scmp.eq.s32.totalorder %s17, 4
      %p51 = por %p49, %p50
      %p52 = scmp.ne.s32.totalorder %s43, %s44
      %p53 = scmp.eq.s32.totalorder %s17, 0
      %p54 = por %p52, %p53
      %p55 = scmp.ne.s32.totalorder %s43, %s44
      %p56 = scmp.eq.s32.totalorder %s18, 4
      %p57 = por %p55, %p56
      %p59 = scmp.ne.s32.totalorder %s44, %s58
      %p60 = scmp.eq.s32.totalorder %s18, 0
      %p61 = por %p59, %p60
      %s62 = ssub.s32 %s12, %s19
      %p63 = scmp.eq.s32.totalorder %s62, 0
      %s65 = sadd.s32 %s64, 1
      %s66 = scalar_select %p63, %s64, %s65
      %p69 = pneg %p63
      %p70 = scmp.eq.s32.totalorder %s12, 4
      %p71 = por %p69, %p70
      %p72 = scmp.ne.s32.totalorder %s64, %s67
      %p73 = scmp.eq.s32.totalorder %s12, 0
      %p74 = por %p72, %p73
      %p75 = scmp.ne.s32.totalorder %s64, %s67
      %p76 = scmp.eq.s32.totalorder %s17, 4
      %p77 = por %p75, %p76
      %p78 = scmp.ne.s32.totalorder %s67, %s68
      %p79 = scmp.eq.s32.totalorder %s17, 0
      %p80 = por %p78, %p79
      %p81 = scmp.ne.s32.totalorder %s67, %s68
      %p82 = scmp.eq.s32.totalorder %s18, 4
      %p83 = por %p81, %p82
      %p85 = scmp.ne.s32.totalorder %s68, %s84
      %p86 = scmp.eq.s32.totalorder %s18, 0
      %p87 = por %p85, %p86
      %s88 = ssub.s32 %s12, %s19
      %p89 = scmp.eq.s32.totalorder %s88, 0
      %s91 = sadd.s32 %s90, 1
      %s92 = scalar_select %p89, %s90, %s91
      %p95 = pneg %p89
      %p96 = scmp.eq.s32.totalorder %s12, 4
      %p97 = por %p95, %p96
      %p98 = scmp.ne.s32.totalorder %s90, %s93
      %p99 = scmp.eq.s32.totalorder %s12, 0
      %p100 = por %p98, %p99
      %p101 = scmp.ne.s32.totalorder %s90, %s93
      %p102 = scmp.eq.s32.totalorder %s17, 4
      %p103 = por %p101, %p102
      %p104 = scmp.ne.s32.totalorder %s93, %s94
      %p105 = scmp.eq.s32.totalorder %s17, 0
      %p106 = por %p104, %p105
      %p107 = scmp.ne.s32.totalorder %s93, %s94
      %p108 = scmp.eq.s32.totalorder %s18, 4
      %p109 = por %p107, %p108
      %p111 = scmp.ne.s32.totalorder %s94, %s110
      %p112 = scmp.eq.s32.totalorder %s18, 0
      %p113 = por %p111, %p112
      %s114 = ssub.s32 %s12, %s19
      %p115 = scmp.eq.s32.totalorder %s114, 0
      %s117 = sadd.s32 %s116, 1
      %s118 = scalar_select %p115, %s116, %s117
      %p121 = pneg %p115
      %p122 = scmp.eq.s32.totalorder %s12, 4
      %p123 = por %p121, %p122
      %p124 = scmp.ne.s32.totalorder %s116, %s119
      %p125 = scmp.eq.s32.totalorder %s12, 0
      %p126 = por %p124, %p125
      %p127 = scmp.ne.s32.totalorder %s116, %s119
      %p128 = scmp.eq.s32.totalorder %s17, 4
      %p129 = por %p127, %p128
      %p130 = scmp.ne.s32.totalorder %s119, %s120
      %p131 = scmp.eq.s32.totalorder %s17, 0
      %p132 = por %p130, %p131
      %p133 = scmp.ne.s32.totalorder %s119, %s120
      %p134 = scmp.eq.s32.totalorder %s18, 4
      %p135 = por %p133, %p134
      %p137 = scmp.ne.s32.totalorder %s120, %s136
      %p138 = scmp.eq.s32.totalorder %s18, 0
      %p139 = por %p137, %p138
      %p140 = scmp.le.s32.totalorder 1, %s12
      %p141 = scmp.lt.s32.totalorder %s12, 6
      %p142 = pnand %p140, %p141
      %p143 = pneg %p142
      // Predicated region
      $region9: #{model_forward.1} parent=5 // pred_check
        _
      $region10: #{model_forward.1} parent=5 // pred_check_branch
        %145 = sbr.rel (%p142) target = $region12
      $region11: #{model_forward.1} parent=5 // pred_region
        %s146 = ssub.s32 %s12, 1
        // Predicated region
        $region13: #{model_forward.1} parent=11 // pred_check
          %p147 = pneg %p33
        $region14: #{model_forward.1} parent=11 // pred_check_branch
          %149 = sbr.rel (%p147) target = $region16
        $region15: #{model_forward.1} parent=11 // pred_region
          %151 = vsyncadd [#allocation3], 0
          %s153 = sshll.u32 %s0, 4
          %s154 = int_to_ptr.vmem [resolvable:$true] %s153
          %156 = dma.vmem_to_smem %s154, 64, [#allocation2], [#allocation3]
        $region16: #{model_forward.1} parent=11 // pred_fallthru
          _
        // Predicated region
        $region17: #{model_forward.1} parent=11 // pred_check
          %p157 = pneg %p54
        $region18: #{model_forward.1} parent=11 // pred_check_branch
          %159 = sbr.rel (%p157) target = $region20
        $region19: #{model_forward.1} parent=11 // pred_region
          %161 = vsyncadd [#allocation5], 0
          %s163 = sshll.u32 %s1, 4
          %s164 = int_to_ptr.vmem [resolvable:$true] %s163
          %166 = dma.vmem_to_smem %s164, 16, [#allocation4], [#allocation5]
        $region20: #{model_forward.1} parent=11 // pred_fallthru
          _
      $region12: #{model_forward.1} parent=5 // pred_fallthru
        _
      %p167 = scmp.lt.s32.totalorder %s12, 5
      // Predicated region
      $region21: #{model_forward.1} parent=5 // pred_check
        %p168 = pneg %p167
      $region22: #{model_forward.1} parent=5 // pred_check_branch
        %170 = sbr.rel (%p168) target = $region24
      $region23: #{model_forward.1} parent=5 // pred_region
        // Predicated region
        $region25: #{model_forward.1} parent=23 // pred_check
          %p171 = pneg %p74
        $region26: #{model_forward.1} parent=23 // pred_check_branch
          %173 = sbr.rel (%p171) target = $region28
        $region27: #{model_forward.1} parent=23 // pred_region
          %s174 = smul.u32 8, %s12
          %p175 = scmp.lt.s32.totalorder %s174, 39
          %s176 = scalar_select %p175, %s174, 39
          %s177 = smul.addr %s176, 8
          %s178 = scalar_lea.vmem %s2, %s177
          %s179 = smul.u32 8, %s12
        $region28: #{model_forward.1} parent=23 // pred_fallthru
          _
        // Predicated region
        $region29: #{model_forward.1} parent=23 // pred_check
          %p180 = pneg %p100
        $region30: #{model_forward.1} parent=23 // pred_check_branch
          %182 = sbr.rel (%p180) target = $region32
        $region31: #{model_forward.1} parent=23 // pred_region
          %s183 = smul.u32 8, %s12
          %p184 = scmp.lt.s32.totalorder %s183, 39
          %s185 = scalar_select %p184, %s183, 39
          %s186 = smul.addr %s185, 8
          %s187 = scalar_lea.vmem %s3, %s186
          %s188 = smul.u32 8, %s12
        $region32: #{model_forward.1} parent=23 // pred_fallthru
          _
      $region24: #{model_forward.1} parent=5 // pred_fallthru
        _
      %p189 = scmp.le.s32.totalorder 1, %s12
      %p190 = scmp.lt.s32.totalorder %s12, 6
      %p191 = pnand %p189, %p190
      %p192 = pneg %p191
      // Predicated region
      $region33: #{model_forward.1} parent=5 // pred_check
        _
      $region34: #{model_forward.1} parent=5 // pred_check_branch
        %194 = sbr.rel (%p191) target = $region36
      $region35: #{model_forward.1} parent=5 // pred_region
        %s195 = ssub.s32 %s12, 1
        // Predicated region
        $region37: #{model_forward.1} parent=35 // pred_check
          %p196 = pneg %p33
        $region38: #{model_forward.1} parent=35 // pred_check_branch
          %198 = sbr.rel (%p196) target = $region40
        $region39: #{model_forward.1} parent=35 // pred_region
          %200 = dma.done [#allocation3], 64
        $region40: #{model_forward.1} parent=35 // pred_fallthru
          _
        // Predicated region
        $region41: #{model_forward.1} parent=35 // pred_check
          %p201 = pneg %p54
        $region42: #{model_forward.1} parent=35 // pred_check_branch
          %203 = sbr.rel (%p201) target = $region44
        $region43: #{model_forward.1} parent=35 // pred_region
          %205 = dma.done [#allocation5], 16
        $region44: #{model_forward.1} parent=35 // pred_fallthru
          _
        %206 = sfence
        %p207 = pneg %p33
        %p208 = pneg %p30
        %p209 = pneg %p54
        %p210 = pneg %p51
        %s211 = smul.u32 8, %s17
        %p212 = scmp.lt.s32.totalorder %s211, 39
        %s213 = scalar_select %p212, %s211, 39
        %s214 = smul.addr %s213, 8
        %s215 = scalar_lea.vmem %s2, %s214
        %p216 = pneg %p80
        %p217 = pneg %p77
        %s218 = smul.u32 8, %s17
        %p219 = scmp.lt.s32.totalorder %s218, 39
        %s220 = scalar_select %p219, %s218, 39
        %s221 = smul.addr %s220, 8
        %s222 = scalar_lea.vmem %s3, %s221
        %p223 = pneg %p106
        %p224 = pneg %p103
        %p225 = pneg %p132
        %p226 = pneg %p129
        %s227 = smul.u32 8, %s17
        %p228 = scmp.lt.s32.totalorder %s227, 39
        %s229 = scalar_select %p228, %s227, 39
        %s230 = smul.addr %s229, 8
        %s231 = scalar_lea.vmem %s4, %s230
        %s232 = smul.u32 8, %s17
        %p233 = scmp.lt.s32.totalorder %s232, 39
        %s234 = scalar_select %p233, %s232, 39
        %s235 = smul.addr %s234, 8
        %s236 = scalar_lea.vmem %s2, %s235
        %s237 = smul.u32 8, %s17
        %s238 = smul.u32 8, %s17
        %p239 = scmp.lt.s32.totalorder %s238, 39
        %s240 = scalar_select %p239, %s238, 39
        %s241 = smul.addr %s240, 8
        %s242 = scalar_lea.vmem %s3, %s241
        %s243 = smul.u32 8, %s17
        %s244 = smul.u32 8, %s17
        %p245 = scmp.lt.s32.totalorder %s244, 39
        %s246 = scalar_select %p245, %s244, 39
        %s247 = smul.addr %s246, 8
        %s248 = scalar_lea.vmem %s4, %s247
        %s249 = smul.u32 8, %s17
        %v250 = vld [vmem:[%s236] ss:$8 sm:$0xf]
        %v251 = vld [vmem:[%s236] ss:$8 sm:$0xf0]
        %v252 = vor.u32 %v250, %v251
        %s253 = scalar_lea.vmem %s236, 1
        %v254 = vld [vmem:[%s253] ss:$8 sm:$0xf]
        %v255 = vld [vmem:[%s253] ss:$8 sm:$0xf0]
        %v256 = vor.u32 %v254, %v255
        %s257 = scalar_lea.vmem %s236, 2
        %v258 = vld [vmem:[%s257] ss:$8 sm:$0xf]
        %v259 = vld [vmem:[%s257] ss:$8 sm:$0xf0]
        %v260 = vor.u32 %v258, %v259
        %s261 = sld [smem:[#allocation2]]
        %v262 = vstv %s261
        %v263 = vmul.f32 %v262, %v252
        %s264 = sld [smem:[#allocation2 + $0x1]]
        %v265 = vstv %s264
        %v266 = vmul.f32 %v265, %v256
        %v267 = vadd.f32 %v263, %v266
        %s268 = sld [smem:[#allocation2 + $0x2]]
        %v269 = vstv %s268
        %v270 = vmul.f32 %v269, %v260
        %v271 = vadd.f32 %v267, %v270
        %s272 = sld [smem:[#allocation4]]
        %v273 = vstv %s272
        %v274 = vadd.f32 %v271, %v273
        %v275 = vld [vmem:[%s242] ss:$8 sm:$0xf]
        %v276 = vld [vmem:[%s242] ss:$8 sm:$0xf0]
        %v277 = vor.u32 %v275, %v276
        %v278 = vadd.f32 %v274, %v277
        %279 = vst [vmem:[%s248] ss:$8 sm:$0xf] %v278
        %280 = vst [vmem:[%s248] ss:$8 sm:$0xf0] %v278
        %s281 = sld [smem:[#allocation2 + $0x80]]
        %v282 = vstv %s281
        %v283 = vmul.f32 %v282, %v252
        %s284 = sld [smem:[#allocation2 + $0x81]]
        %v285 = vstv %s284
        %v286 = vmul.f32 %v285, %v256
        %v287 = vadd.f32 %v283, %v286
        %s288 = sld [smem:[#allocation2 + $0x82]]
        %v289 = vstv %s288
        %v290 = vmul.f32 %v289, %v260
        %v291 = vadd.f32 %v287, %v290
        %s292 = sld [smem:[#allocation4 + $0x1]]
        %v293 = vstv %s292
        %v294 = vadd.f32 %v291, %v293
        %s295 = scalar_lea.vmem %s242, 1
        %v296 = vld [vmem:[%s295] ss:$8 sm:$0xf]
        %v297 = vld [vmem:[%s295] ss:$8 sm:$0xf0]
        %v298 = vor.u32 %v296, %v297
        %v299 = vadd.f32 %v294, %v298
        %s300 = scalar_lea.vmem %s248, 1
        %301 = vst [vmem:[%s300] ss:$8 sm:$0xf] %v299
        %302 = vst [vmem:[%s300] ss:$8 sm:$0xf0] %v299
        %s303 = sld [smem:[#allocation2 + $0x100]]
        %v304 = vstv %s303
        %v305 = vmul.f32 %v304, %v252
        %s306 = sld [smem:[#allocation2 + $0x101]]
        %v307 = vstv %s306
        %v308 = vmul.f32 %v307, %v256
        %v309 = vadd.f32 %v305, %v308
        %s310 = sld [smem:[#allocation2 + $0x102]]
        %v311 = vstv %s310
        %v312 = vmul.f32 %v311, %v260
        %v313 = vadd.f32 %v309, %v312
        %s314 = sld [smem:[#allocation4 + $0x2]]
        %v315 = vstv %s314
        %v316 = vadd.f32 %v313, %v315
        %s317 = scalar_lea.vmem %s242, 2
        %v318 = vld [vmem:[%s317] ss:$8 sm:$0xf]
        %v319 = vld [vmem:[%s317] ss:$8 sm:$0xf0]
        %v320 = vor.u32 %v318, %v319
        %v321 = vadd.f32 %v316, %v320
        %s322 = scalar_lea.vmem %s248, 2
        %323 = vst [vmem:[%s322] ss:$8 sm:$0xf] %v321
        %324 = vst [vmem:[%s322] ss:$8 sm:$0xf0] %v321
        %s325 = smul.u32 8, %s17
        %p326 = scmp.lt.s32.totalorder %s325, 39
        %s327 = scalar_select %p326, %s325, 39
        %s328 = smul.addr %s327, 8
        %s329 = scalar_lea.vmem %s4, %s328
        // Predicated region
        $region45: #{model_forward.1} parent=35 // pred_check
          %p330 = pneg %p129
        $region46: #{model_forward.1} parent=35 // pred_check_branch
          %332 = sbr.rel (%p330) target = $region48
        $region47: #{model_forward.1} parent=35 // pred_region
          %s333 = smul.u32 8, %s17
        $region48: #{model_forward.1} parent=35 // pred_fallthru
          _
      $region36: #{model_forward.1} parent=5 // pred_fallthru
        _
      %p334 = scmp.le.s32.totalorder 2, %s12
      // Predicated region
      $region49: #{model_forward.1} parent=5 // pred_check
        %p335 = pneg %p334
      $region50: #{model_forward.1} parent=5 // pred_check_branch
        %337 = sbr.rel (%p335) target = $region52
      $region51: #{model_forward.1} parent=5 // pred_region
        %s338 = ssub.s32 %s12, 2
        // Predicated region
        $region53: #{model_forward.1} parent=51 // pred_check
          %p339 = pneg %p135
        $region54: #{model_forward.1} parent=51 // pred_check_branch
          %341 = sbr.rel (%p339) target = $region56
        $region55: #{model_forward.1} parent=51 // pred_region
          %s342 = smul.u32 8, %s18
          %p343 = scmp.lt.s32.totalorder %s342, 39
          %s344 = scalar_select %p343, %s342, 39
          %s345 = smul.addr %s344, 8
          %s346 = scalar_lea.vmem %s4, %s345
        $region56: #{model_forward.1} parent=51 // pred_fallthru
          _
      $region52: #{model_forward.1} parent=5 // pred_fallthru
        _
    $region6: #{model_forward.1} parent=1 // loop_footer
      %s16 = sadd.s32 1, %s12
    $region7: #{model_forward.1} parent=1 // loop_footer_branch
      %11 = sbr.rel target = $region3
    $region8: #{model_forward.1} parent=1 // loop_exit
      _
    %347 = vsyncpa [#allocation3], 1
    %s348 = scalar_lea.sflag [#allocation3], 1
    %349 = vsyncpa %s348, 1
    %350 = vsyncpa [#allocation5], 1

</llo_original>
